<compile_context>
chip_gen: v5e
topology: v5e:2x2
jax: 0.10.0
libtpu: 0.0.40
codegen_flags: <defaults>
</compile_context>

<pallas_src>
import itertools

import numpy as np
import jax
import jax.numpy as jnp
from jax import lax
from jax.experimental import pallas as pl
from jax.experimental.pallas import tpu as pltpu


def make_k_wg(cov, scale, *, w_dims=None, order=3, period=2.0 * np.pi,
              normalize=True, exp_in_bf16=False,
              max_rows_per_step=64, target_grid_steps=8):
    """Build a jitted forward(x, y) for K_wg with the given (concrete) params.

    cov / scale must be concrete (module parameters), they are baked into the
    kernel at trace time.
    """
    if w_dims is None:
        w_dims = []
    w_dims = list(w_dims)

    # ---------------- trace-time parameter prep (float64 numpy) ----------------
    cov_np = np.asarray(cov, np.float64)
    D = cov_np.shape[-1]
    F_shape = tuple(cov_np.shape[:-2])
    C = int(np.prod(F_shape)) if F_shape else 1
    W = len(w_dims)
    covs = cov_np.reshape(C, D, D)

    # Cholesky: validates PSD and gives a stable determinant; inverse in f64.
    L = np.linalg.cholesky(covs)
    det = np.prod(np.diagonal(L, axis1=-2, axis2=-1), axis=-1) ** 2
    inv_cov = np.linalg.inv(covs)
    S = -0.5 * inv_cov                                   # fold -0.5 into tables

    PAIRS = tuple((i, j) for i in range(D) for j in range(i, D))
    # quadratic form over unique (i<=j) pairs, off-diagonal doubled
    quad_c = [[float(S[k, i, j] * (1.0 if i == j else 2.0)) for (i, j) in PAIRS]
              for k in range(C)]
    # linear forms on wrapped dims: 2*S[w_dim, :]
    lin_c = [[[float(2.0 * S[k, w_dims[w], j]) for j in range(D)]
              for w in range(W)] for k in range(C)]

    scale_np = np.broadcast_to(np.asarray(scale, np.float64), F_shape).reshape(C)
    if normalize:
        coef = scale_np / np.sqrt((2.0 * np.pi) ** D * det)
    else:
        coef = scale_np.astype(np.float64).copy()
    coef_c = [float(v) for v in coef]

    # wrap offsets: per-channel pruning + canonical +/- pairing, all baked.
    PRUNE = 88.0                       # exp(-88) ~ 6e-39: below f32 relevance
    pairs_c = [[] for _ in range(C)]
    if W > 0:
        lam_min = np.linalg.eigvalsh(inv_cov)[:, 0]      # ascending -> min eig
        all_offs = [np.asarray(o, np.float64)
                    for o in itertools.product(range(-order, order + 1), repeat=W)]
        canon = [o for o in all_offs
                 if np.any(o != 0) and o[np.nonzero(o)[0][0]] > 0]
        for k in range(C):
            plist = []
            for o in canon:
                # rigorous lower bound on the quadratic form for this offset
                dist2 = float(np.sum(((np.abs(o) - 0.5) * period) ** 2 * (o != 0)))
                if 0.5 * lam_min[k] * dist2 > PRUNE:
                    continue                              # +o and -o underflow
                off_full = np.zeros((D,), np.float64)
                off_full[w_dims] = o * period
                cconst = float(off_full @ S[k] @ off_full)
                plist.append((cconst, tuple(float(v * period) for v in o)))
            pairs_c[k] = plist

    if exp_in_bf16:
        # lower-precision exp (v6e/v7x EUP bf16) — accuracy ~1e-3 relative
        def _exp(a):
            return jnp.exp(a.astype(jnp.bfloat16)).astype(jnp.float32)
    else:
        _exp = jnp.exp

    # ---------------- kernel body (all coefficients are baked constants) -------
    def _build_kernel(SUB, n_sub):
        def kernel(z_ref, out_ref):
            # z_ref  : (D, R_blk, 128) VMEM, sublane/lane dense
            # out_ref: (C, R_blk, 128) VMEM
            def chunk(base):
                zs = [z_ref[d, pl.ds(base, SUB), :] for d in range(D)]
                prods = [zs[i] * zs[j] for (i, j) in PAIRS]   # shared across k
                for k in range(C):
                    q0 = quad_c[k][0] * prods[0]
                    for p in range(1, len(PAIRS)):
                        q0 = q0 + quad_c[k][p] * prods[p]
                    acc = _exp(q0)                            # n = 0 term
                    if pairs_c[k]:
                        lins = []
                        for w in range(W):
                            lw = lin_c[k][w][0] * zs[0]
                            for j in range(1, D):
                                lw = lw + lin_c[k][w][j] * zs[j]
                            lins.append(lw)
                        for (cconst, off) in pairs_c[k]:
                            b = q0 + cconst                   # shared by +/- pair
                            t = None
                            for w in range(W):
                                if off[w] != 0.0:
                                    term = off[w] * lins[w]
                                    t = term if t is None else t + term
                            acc = acc + _exp(b + t) + _exp(b - t)
                    # per-channel, full-lane, unmasked store
                    out_ref[k, pl.ds(base, SUB), :] = coef_c[k] * acc

            if n_sub == 1:
                chunk(0)
            else:
                def body(c, carry):
                    chunk(pl.multiple_of(c * SUB, SUB))
                    return carry
                lax.fori_loop(0, n_sub, body, 0)
        return kernel

    LANES = 128

    # ---------------- jitted data path ----------------
    @jax.jit
    def forward(x, y=0.0):
        z = jnp.asarray(x, jnp.float32) - jnp.asarray(y, jnp.float32)
        if W > 0:
            mask = np.zeros((D,), np.bool_)
            mask[w_dims] = True
            zw = jnp.remainder(z + 0.5 * period, period) - 0.5 * period
            z = jnp.where(jnp.asarray(mask), zw, z)       # single fused pass
        input_shape = z.shape[:-1]
        N = int(np.prod(input_shape)) if input_shape else 1
        z_flat = z.reshape(N, D)

        n_rows = -(-N // LANES)                           # ceil(N / 128)
        if n_rows <= 8:
            R_blk = n_rows                                # full-extent tiny block
        else:
            n_rows8 = -(-n_rows // 8) * 8
            want = -(-n_rows8 // target_grid_steps)       # rows/step for >= target steps
            R_blk = max(8, min(max_rows_per_step, -(-want // 8) * 8))
        num_blocks = -(-n_rows // R_blk)
        n_rows_pad = num_blocks * R_blk
        N_pad = n_rows_pad * LANES
        SUB = 8 if R_blk >= 8 else R_blk
        n_sub = R_blk // SUB

        # block-major, lane/sublane-dense layout: one contiguous DMA per step
        z_pad = jnp.pad(z_flat, ((0, N_pad - N), (0, 0)))
        z_t = z_pad.reshape(num_blocks, R_blk, LANES, D).transpose(0, 3, 1, 2)

        out = pl.pallas_call(
            _build_kernel(SUB, n_sub),
            out_shape=jax.ShapeDtypeStruct((num_blocks, C, R_blk, LANES),
                                           jnp.float32),
            grid=(num_blocks,),
            in_specs=[pl.BlockSpec((pl.Squeezed(), D, R_blk, LANES),
                                   lambda i: (i, 0, 0, 0))],
            out_specs=pl.BlockSpec((pl.Squeezed(), C, R_blk, LANES),
                                   lambda i: (i, 0, 0, 0)),
            compiler_params=pltpu.CompilerParams(
                dimension_semantics=("parallel",)),
        )(z_t)

        # TODO(synk): a channel-major consumer could take `out` directly and
        # skip this transpose; it is kept to match the module's output layout.
        res = out.transpose(0, 2, 3, 1).reshape(N_pad, C)[:N]
        return res.reshape(input_shape + F_shape)

    return forward


def k_wg_forward(x, y, cov, scale, **kwargs):
    """One-shot convenience wrapper: K_wg(scale, cov, ...).forward(x, y)."""
    return make_k_wg(cov, scale, **kwargs)(x, y)


def _reference_forward(x, y, cov, scale, w_dims, order, period):
    """Pure-JAX reference of K_wg.forward (any number of wrapped dims)."""
    D = cov.shape[-1]
    F_shape = cov.shape[:-2]
    cov_f = cov.reshape(-1, D, D)
    inv_cov = jnp.linalg.inv(cov_f)
    norm = 1.0 / jnp.sqrt((2.0 * jnp.pi) ** D * jnp.linalg.det(cov_f))
    z = x - y
    for d in w_dims:
        z = z.at[..., d].set(
            jnp.remainder(z[..., d] + period / 2.0, period) - period / 2.0)
    if w_dims:
        res = 0.0
        for ns in itertools.product(range(-order, order + 1), repeat=len(w_dims)):
            zz = z
            for d, n in zip(w_dims, ns):
                zz = zz.at[..., d].add(n * period)
            q = jnp.einsum("...i,kij,...j->...k", zz, inv_cov, zz)
            res = res + jnp.exp(-0.5 * q)
    else:
        q = jnp.einsum("...i,kij,...j->...k", z, inv_cov, z)
        res = jnp.exp(-0.5 * q)
    res = norm * res
    res = jnp.broadcast_to(scale, F_shape).reshape(-1) * res
    return res.reshape(*z.shape[:-1], *F_shape)


if __name__ == "__main__":
    key = jax.random.PRNGKey(0)
    period = 2.0 * np.pi

    def make_cov(sig, rho):
        Ck = len(sig)
        c = np.zeros((Ck, 2, 2), np.float32)
        for k in range(Ck):
            s2 = sig[k] ** 2
            c[k] = [[s2, rho[k] * s2], [rho[k] * s2, s2]]
        return jnp.asarray(c)

    # --- test 1: single wrapped dim, tiny N (single small block) ---
    cov1 = make_cov([0.5, 0.8, 1.0, 1.3], [0.0, 0.2, -0.3, 0.1])
    scale1 = jnp.asarray([1.0, 0.5, 2.0, 1.5], jnp.float32)
    k1, key = jax.random.split(key)
    x1 = jax.random.uniform(k1, (256, 2), jnp.float32, minval=-np.pi, maxval=np.pi)
    out1 = jax.block_until_ready(
        k_wg_forward(x1, 0.0, cov1, scale1, w_dims=[1], order=3, period=period))
    ref1 = _reference_forward(x1, 0.0, cov1, scale1, [1], 3, period)
    assert out1.shape == (256, 4), out1.shape
    assert jnp.allclose(out1, ref1, rtol=1e-5, atol=1e-5), \
        float(jnp.max(jnp.abs(out1 - ref1)))

    # --- test 2: larger N -> multiple grid steps + in-kernel sub-chunk loop ---
    k2, key = jax.random.split(key)
    x2 = jax.random.uniform(k2, (4000, 2), jnp.float32, minval=-np.pi, maxval=np.pi)
    out2 = jax.block_until_ready(
        k_wg_forward(x2, 0.0, cov1, scale1, w_dims=[1], order=3, period=period,
                     target_grid_steps=2))
    ref2 = _reference_forward(x2, 0.0, cov1, scale1, [1], 3, period)
    assert out2.shape == (4000, 4), out2.shape
    assert jnp.allclose(out2, ref2, rtol=1e-5, atol=1e-5), \
        float(jnp.max(jnp.abs(out2 - ref2)))

    # --- test 3: two wrapped dims (W=2 cartesian wrap offsets) ---
    cov3 = make_cov([0.7, 1.1], [0.1, -0.2])
    scale3 = jnp.asarray([1.0, 0.3], jnp.float32)
    k3, key = jax.random.split(key)
    x3 = jax.random.uniform(k3, (200, 2), jnp.float32, minval=-np.pi, maxval=np.pi)
    out3 = jax.block_until_ready(
        k_wg_forward(x3, 0.0, cov3, scale3, w_dims=[0, 1], order=2, period=period))
    ref3 = _reference_forward(x3, 0.0, cov3, scale3, [0, 1], 2, period)
    assert out3.shape == (200, 2), out3.shape
    assert jnp.allclose(out3, ref3, rtol=1e-5, atol=1e-5), \
        float(jnp.max(jnp.abs(out3 - ref3)))

    # --- test 4: no wrapped dims (plain anisotropic Gaussian path) ---
    k4, key = jax.random.split(key)
    x4 = jax.random.uniform(k4, (300, 2), jnp.float32, minval=-np.pi, maxval=np.pi)
    out4 = jax.block_until_ready(
        k_wg_forward(x4, 0.0, cov3, scale3, w_dims=[], order=3, period=period))
    ref4 = _reference_forward(x4, 0.0, cov3, scale3, [], 3, period)
    assert out4.shape == (300, 2), out4.shape
    assert jnp.allclose(out4, ref4, rtol=1e-5, atol=1e-5), \
        float(jnp.max(jnp.abs(out4 - ref4)))

    print("KERNEL_OK")
</pallas_src>

<mosaic_0001>
module attributes {stable_mosaic.version = 11 : i64} {
  func.func @kernel(%arg0: i32, %arg1: memref<1x2x2x128xf32, #tpu.memory_space<vmem>>, %arg2: memref<1x4x2x128xf32, #tpu.memory_space<vmem>>) attributes {dimension_semantics = [#tpu.dimension_semantics<parallel>], iteration_bounds = array<i64: 1>, scalar_prefetch = 0 : i64, scratch_operands = 0 : i64, tpu.core_type = #tpu.core_type<tc>, window_params = [{transform_indices = @transform_0, window_bounds = array<i64: 1, 2, 2, 128>}, {transform_indices = @transform_1, window_bounds = array<i64: 1, 4, 2, 128>}]} {
    %c0 = arith.constant 0 : index
    %c0_0 = arith.constant 0 : index
    %c0_1 = arith.constant 0 : index
    %c0_2 = arith.constant 0 : index
    %0 = vector.load %arg1[%c0, %c0_0, %c0_1, %c0_2] : memref<1x2x2x128xf32, #tpu.memory_space<vmem>>, vector<1x1x2x128xf32>
    %1 = vector.shape_cast %0 : vector<1x1x2x128xf32> to vector<2x128xf32>
    %c0_3 = arith.constant 0 : index
    %c1 = arith.constant 1 : index
    %c0_4 = arith.constant 0 : index
    %c0_5 = arith.constant 0 : index
    %2 = vector.load %arg1[%c0_3, %c1, %c0_4, %c0_5] : memref<1x2x2x128xf32, #tpu.memory_space<vmem>>, vector<1x1x2x128xf32>
    %3 = vector.shape_cast %2 : vector<1x1x2x128xf32> to vector<2x128xf32>
    %4 = arith.mulf %1, %1 : vector<2x128xf32>
    %5 = arith.mulf %1, %3 : vector<2x128xf32>
    %6 = arith.mulf %3, %3 : vector<2x128xf32>
    %cst = arith.constant -2.000000e+00 : f32
    %7 = vector.broadcast %cst : f32 to vector<2x128xf32>
    %8 = arith.mulf %7, %4 : vector<2x128xf32>
    %cst_6 = arith.constant -0.000000e+00 : f32
    %9 = vector.broadcast %cst_6 : f32 to vector<2x128xf32>
    %10 = arith.mulf %9, %5 : vector<2x128xf32>
    %11 = arith.addf %8, %10 : vector<2x128xf32>
    %cst_7 = arith.constant -2.000000e+00 : f32
    %12 = vector.broadcast %cst_7 : f32 to vector<2x128xf32>
    %13 = arith.mulf %12, %6 : vector<2x128xf32>
    %14 = arith.addf %11, %13 : vector<2x128xf32>
    %15 = math.exp %14 : vector<2x128xf32>
    %cst_8 = arith.constant -0.000000e+00 : f32
    %16 = vector.broadcast %cst_8 : f32 to vector<2x128xf32>
    %17 = arith.mulf %16, %1 : vector<2x128xf32>
    %cst_9 = arith.constant -4.000000e+00 : f32
    %18 = vector.broadcast %cst_9 : f32 to vector<2x128xf32>
    %19 = arith.mulf %18, %3 : vector<2x128xf32>
    %20 = arith.addf %17, %19 : vector<2x128xf32>
    %cst_10 = arith.constant -78.9568328 : f32
    %21 = vector.broadcast %cst_10 : f32 to vector<2x128xf32>
    %22 = arith.addf %14, %21 : vector<2x128xf32>
    %cst_11 = arith.constant 6.28318548 : f32
    %23 = vector.broadcast %cst_11 : f32 to vector<2x128xf32>
    %24 = arith.mulf %23, %20 : vector<2x128xf32>
    %25 = arith.addf %22, %24 : vector<2x128xf32>
    %26 = math.exp %25 : vector<2x128xf32>
    %27 = arith.addf %15, %26 : vector<2x128xf32>
    %28 = arith.subf %22, %24 : vector<2x128xf32>
    %29 = math.exp %28 : vector<2x128xf32>
    %30 = arith.addf %27, %29 : vector<2x128xf32>
    %cst_12 = arith.constant 0.636619746 : f32
    %31 = vector.broadcast %cst_12 : f32 to vector<2x128xf32>
    %32 = arith.mulf %31, %30 : vector<2x128xf32>
    %c0_13 = arith.constant 0 : index
    %c0_14 = arith.constant 0 : index
    %c0_15 = arith.constant 0 : index
    %c0_16 = arith.constant 0 : index
    %33 = vector.load %arg2[%c0_13, %c0_14, %c0_15, %c0_16] : memref<1x4x2x128xf32, #tpu.memory_space<vmem>>, vector<1x1x2x128xf32>
    %34 = vector.shape_cast %33 : vector<1x1x2x128xf32> to vector<2x128xf32>
    %35 = vector.shape_cast %32 : vector<2x128xf32> to vector<1x1x2x128xf32>
    tpu.vector_store %arg2[%c0_13, %c0_14, %c0_15, %c0_16], %35 {strides = array<i32>} : memref<1x4x2x128xf32, #tpu.memory_space<vmem>>, vector<1x1x2x128xf32>,
    %cst_17 = arith.constant -0.813802123 : f32
    %36 = vector.broadcast %cst_17 : f32 to vector<2x128xf32>
    %37 = arith.mulf %36, %4 : vector<2x128xf32>
    %cst_18 = arith.constant 0.325520873 : f32
    %38 = vector.broadcast %cst_18 : f32 to vector<2x128xf32>
    %39 = arith.mulf %38, %5 : vector<2x128xf32>
    %40 = arith.addf %37, %39 : vector<2x128xf32>
    %cst_19 = arith.constant -0.813802123 : f32
    %41 = vector.broadcast %cst_19 : f32 to vector<2x128xf32>
    %42 = arith.mulf %41, %6 : vector<2x128xf32>
    %43 = arith.addf %40, %42 : vector<2x128xf32>
    %44 = math.exp %43 : vector<2x128xf32>
    %cst_20 = arith.constant 0.325520873 : f32
    %45 = vector.broadcast %cst_20 : f32 to vector<2x128xf32>
    %46 = arith.mulf %45, %1 : vector<2x128xf32>
    %cst_21 = arith.constant -1.62760425 : f32
    %47 = vector.broadcast %cst_21 : f32 to vector<2x128xf32>
    %48 = arith.mulf %47, %3 : vector<2x128xf32>
    %49 = arith.addf %46, %48 : vector<2x128xf32>
    %cst_22 = arith.constant -32.1276207 : f32
    %50 = vector.broadcast %cst_22 : f32 to vector<2x128xf32>
    %51 = arith.addf %43, %50 : vector<2x128xf32>
    %cst_23 = arith.constant 6.28318548 : f32
    %52 = vector.broadcast %cst_23 : f32 to vector<2x128xf32>
    %53 = arith.mulf %52, %49 : vector<2x128xf32>
    %54 = arith.addf %51, %53 : vector<2x128xf32>
    %55 = math.exp %54 : vector<2x128xf32>
    %56 = arith.addf %44, %55 : vector<2x128xf32>
    %57 = arith.subf %51, %53 : vector<2x128xf32>
    %58 = math.exp %57 : vector<2x128xf32>
    %59 = arith.addf %56, %58 : vector<2x128xf32>
    %cst_24 = arith.constant -128.510483 : f32
    %60 = vector.broadcast %cst_24 : f32 to vector<2x128xf32>
    %61 = arith.addf %43, %60 : vector<2x128xf32>
    %cst_25 = arith.constant 12.566371 : f32
    %62 = vector.broadcast %cst_25 : f32 to vector<2x128xf32>
    %63 = arith.mulf %62, %49 : vector<2x128xf32>
    %64 = arith.addf %61, %63 : vector<2x128xf32>
    %65 = math.exp %64 : vector<2x128xf32>
    %66 = arith.addf %59, %65 : vector<2x128xf32>
    %67 = arith.subf %61, %63 : vector<2x128xf32>
    %68 = math.exp %67 : vector<2x128xf32>
    %69 = arith.addf %66, %68 : vector<2x128xf32>
    %cst_26 = arith.constant 0.126903772 : f32
    %70 = vector.broadcast %cst_26 : f32 to vector<2x128xf32>
    %71 = arith.mulf %70, %69 : vector<2x128xf32>
    %c0_27 = arith.constant 0 : index
    %c1_28 = arith.constant 1 : index
    %c0_29 = arith.constant 0 : index
    %c0_30 = arith.constant 0 : index
    %72 = vector.load %arg2[%c0_27, %c1_28, %c0_29, %c0_30] : memref<1x4x2x128xf32, #tpu.memory_space<vmem>>, vector<1x1x2x128xf32>
    %73 = vector.shape_cast %72 : vector<1x1x2x128xf32> to vector<2x128xf32>
    %74 = vector.shape_cast %71 : vector<2x128xf32> to vector<1x1x2x128xf32>
    tpu.vector_store %arg2[%c0_27, %c1_28, %c0_29, %c0_30], %74 {strides = array<i32>} : memref<1x4x2x128xf32, #tpu.memory_space<vmem>>, vector<1x1x2x128xf32>,
    %cst_31 = arith.constant -0.549450576 : f32
    %75 = vector.broadcast %cst_31 : f32 to vector<2x128xf32>
    %76 = arith.mulf %75, %4 : vector<2x128xf32>
    %cst_32 = arith.constant -0.32967034 : f32
    %77 = vector.broadcast %cst_32 : f32 to vector<2x128xf32>
    %78 = arith.mulf %77, %5 : vector<2x128xf32>
    %79 = arith.addf %76, %78 : vector<2x128xf32>
    %cst_33 = arith.constant -0.549450576 : f32
    %80 = vector.broadcast %cst_33 : f32 to vector<2x128xf32>
    %81 = arith.mulf %80, %6 : vector<2x128xf32>
    %82 = arith.addf %79, %81 : vector<2x128xf32>
    %83 = math.exp %82 : vector<2x128xf32>
    %cst_34 = arith.constant -0.32967034 : f32
    %84 = vector.broadcast %cst_34 : f32 to vector<2x128xf32>
    %85 = arith.mulf %84, %1 : vector<2x128xf32>
    %cst_35 = arith.constant -1.09890115 : f32
    %86 = vector.broadcast %cst_35 : f32 to vector<2x128xf32>
    %87 = arith.mulf %86, %3 : vector<2x128xf32>
    %88 = arith.addf %85, %87 : vector<2x128xf32>
    %cst_36 = arith.constant -21.6914387 : f32
    %89 = vector.broadcast %cst_36 : f32 to vector<2x128xf32>
    %90 = arith.addf %82, %89 : vector<2x128xf32>
    %cst_37 = arith.constant 6.28318548 : f32
    %91 = vector.broadcast %cst_37 : f32 to vector<2x128xf32>
    %92 = arith.mulf %91, %88 : vector<2x128xf32>
    %93 = arith.addf %90, %92 : vector<2x128xf32>
    %94 = math.exp %93 : vector<2x128xf32>
    %95 = arith.addf %83, %94 : vector<2x128xf32>
    %96 = arith.subf %90, %92 : vector<2x128xf32>
    %97 = math.exp %96 : vector<2x128xf32>
    %98 = arith.addf %95, %97 : vector<2x128xf32>
    %cst_38 = arith.constant -86.7657547 : f32
    %99 = vector.broadcast %cst_38 : f32 to vector<2x128xf32>
    %100 = arith.addf %82, %99 : vector<2x128xf32>
    %cst_39 = arith.constant 12.566371 : f32
    %101 = vector.broadcast %cst_39 : f32 to vector<2x128xf32>
    %102 = arith.mulf %101, %88 : vector<2x128xf32>
    %103 = arith.addf %100, %102 : vector<2x128xf32>
    %104 = math.exp %103 : vector<2x128xf32>
    %105 = arith.addf %98, %104 : vector<2x128xf32>
    %106 = arith.subf %100, %102 : vector<2x128xf32>
    %107 = math.exp %106 : vector<2x128xf32>
    %108 = arith.addf %105, %107 : vector<2x128xf32>
    %cst_40 = arith.constant 0.333679438 : f32
    %109 = vector.broadcast %cst_40 : f32 to vector<2x128xf32>
    %110 = arith.mulf %109, %108 : vector<2x128xf32>
    %c0_41 = arith.constant 0 : index
    %c2 = arith.constant 2 : index
    %c0_42 = arith.constant 0 : index
    %c0_43 = arith.constant 0 : index
    %111 = vector.load %arg2[%c0_41, %c2, %c0_42, %c0_43] : memref<1x4x2x128xf32, #tpu.memory_space<vmem>>, vector<1x1x2x128xf32>
    %112 = vector.shape_cast %111 : vector<1x1x2x128xf32> to vector<2x128xf32>
    %113 = vector.shape_cast %110 : vector<2x128xf32> to vector<1x1x2x128xf32>
    tpu.vector_store %arg2[%c0_41, %c2, %c0_42, %c0_43], %113 {strides = array<i32>} : memref<1x4x2x128xf32, #tpu.memory_space<vmem>>, vector<1x1x2x128xf32>,
    %cst_44 = arith.constant -0.298846453 : f32
    %114 = vector.broadcast %cst_44 : f32 to vector<2x128xf32>
    %115 = arith.mulf %114, %4 : vector<2x128xf32>
    %cst_45 = arith.constant 0.0597692877 : f32
    %116 = vector.broadcast %cst_45 : f32 to vector<2x128xf32>
    %117 = arith.mulf %116, %5 : vector<2x128xf32>
    %118 = arith.addf %115, %117 : vector<2x128xf32>
    %cst_46 = arith.constant -0.298846453 : f32
    %119 = vector.broadcast %cst_46 : f32 to vector<2x128xf32>
    %120 = arith.mulf %119, %6 : vector<2x128xf32>
    %121 = arith.addf %118, %120 : vector<2x128xf32>
    %122 = math.exp %121 : vector<2x128xf32>
    %cst_47 = arith.constant 0.0597692877 : f32
    %123 = vector.broadcast %cst_47 : f32 to vector<2x128xf32>
    %124 = arith.mulf %123, %1 : vector<2x128xf32>
    %cst_48 = arith.constant -0.597692907 : f32
    %125 = vector.broadcast %cst_48 : f32 to vector<2x128xf32>
    %126 = arith.mulf %125, %3 : vector<2x128xf32>
    %127 = arith.addf %124, %126 : vector<2x128xf32>
    %cst_49 = arith.constant -11.7979851 : f32
    %128 = vector.broadcast %cst_49 : f32 to vector<2x128xf32>
    %129 = arith.addf %121, %128 : vector<2x128xf32>
    %cst_50 = arith.constant 6.28318548 : f32
    %130 = vector.broadcast %cst_50 : f32 to vector<2x128xf32>
    %131 = arith.mulf %130, %127 : vector<2x128xf32>
    %132 = arith.addf %129, %131 : vector<2x128xf32>
    %133 = math.exp %132 : vector<2x128xf32>
    %134 = arith.addf %122, %133 : vector<2x128xf32>
    %135 = arith.subf %129, %131 : vector<2x128xf32>
    %136 = math.exp %135 : vector<2x128xf32>
    %137 = arith.addf %134, %136 : vector<2x128xf32>
    %cst_51 = arith.constant -47.1919403 : f32
    %138 = vector.broadcast %cst_51 : f32 to vector<2x128xf32>
    %139 = arith.addf %121, %138 : vector<2x128xf32>
    %cst_52 = arith.constant 12.566371 : f32
    %140 = vector.broadcast %cst_52 : f32 to vector<2x128xf32>
    %141 = arith.mulf %140, %127 : vector<2x128xf32>
    %142 = arith.addf %139, %141 : vector<2x128xf32>
    %143 = math.exp %142 : vector<2x128xf32>
    %144 = arith.addf %137, %143 : vector<2x128xf32>
    %145 = arith.subf %139, %141 : vector<2x128xf32>
    %146 = math.exp %145 : vector<2x128xf32>
    %147 = arith.addf %144, %146 : vector<2x128xf32>
    %cst_53 = arith.constant -106.181862 : f32
    %148 = vector.broadcast %cst_53 : f32 to vector<2x128xf32>
    %149 = arith.addf %121, %148 : vector<2x128xf32>
    %cst_54 = arith.constant 18.849556 : f32
    %150 = vector.broadcast %cst_54 : f32 to vector<2x128xf32>
    %151 = arith.mulf %150, %127 : vector<2x128xf32>
    %152 = arith.addf %149, %151 : vector<2x128xf32>
    %153 = math.exp %152 : vector<2x128xf32>
    %154 = arith.addf %147, %153 : vector<2x128xf32>
    %155 = arith.subf %149, %151 : vector<2x128xf32>
    %156 = math.exp %155 : vector<2x128xf32>
    %157 = arith.addf %154, %156 : vector<2x128xf32>
    %cst_55 = arith.constant 0.141973436 : f32
    %158 = vector.broadcast %cst_55 : f32 to vector<2x128xf32>
    %159 = arith.mulf %158, %157 : vector<2x128xf32>
    %c0_56 = arith.constant 0 : index
    %c3 = arith.constant 3 : index
    %c0_57 = arith.constant 0 : index
    %c0_58 = arith.constant 0 : index
    %160 = vector.load %arg2[%c0_56, %c3, %c0_57, %c0_58] : memref<1x4x2x128xf32, #tpu.memory_space<vmem>>, vector<1x1x2x128xf32>
    %161 = vector.shape_cast %160 : vector<1x1x2x128xf32> to vector<2x128xf32>
    %162 = vector.shape_cast %159 : vector<2x128xf32> to vector<1x1x2x128xf32>
    tpu.vector_store %arg2[%c0_56, %c3, %c0_57, %c0_58], %162 {strides = array<i32>} : memref<1x4x2x128xf32, #tpu.memory_space<vmem>>, vector<1x1x2x128xf32>,
    return
  }
  func.func @transform_0(%arg0: i32) -> (i32, i32, i32, i32) {
    %c0_i32 = arith.constant 0 : i32
    %c0_i32_0 = arith.constant 0 : i32
    %c0_i32_1 = arith.constant 0 : i32
    %c0_i32_2 = arith.constant 0 : i32
    return %arg0, %c0_i32, %c0_i32_0, %c0_i32_1 : i32, i32, i32, i32
  }
  func.func @transform_1(%arg0: i32) -> (i32, i32, i32, i32) {
    %c0_i32 = arith.constant 0 : i32
    %c0_i32_0 = arith.constant 0 : i32
    %c0_i32_1 = arith.constant 0 : i32
    %c0_i32_2 = arith.constant 0 : i32
    return %arg0, %c0_i32, %c0_i32_0, %c0_i32_1 : i32, i32, i32, i32
  }
}

</mosaic_0001>

<llo_original>
// kernel: forward.1
$region0: #{forward.1}
  #allocation0 [shape = 'u32[]', space=smem, size = 0x4, offset = 0x4, fixed_abs, tag = 'smem constant byte address 0x4 - core index']
  #allocation1 [shape = 'u32[72,128]{1,0:T(1,128)}', space=vmem, size = 0x9000, scoped, tag = 'internal scratch']
  %s0 = inlined_call_operand.vmem [shape: f32[1,2,2,128], index: 0, kind: input, shape index: {}]
  %s1 = inlined_call_operand.vmem [shape: f32[1,4,2,128], index: 1, kind: output, shape index: {}]
  %s2 = sld [smem:[#allocation0]]
  $region14: #{forward.1} parent=0
    _
  %s4 = ssub.s32 1, %s2
  %s5 = scalar_select 0, %s4, %s2
  // Predicated region
  $region2: #{forward.1} parent=0 // pred_check
    _
  $region3: #{forward.1} parent=0 // pred_check_branch
    %7 = sbr.rel (0) target = $region5
  $region4: #{forward.1} parent=0 // pred_region
    _
  $region5: #{forward.1} parent=0 // pred_fallthru
    _
  %v8 = vld [vmem:[%s0] sm:$0x3]
  %s9 = scalar_lea.vmem %s0, 2
  %v10 = vld [vmem:[%s9] sm:$0x3]
  %v11 = vmul.f32 %v8, %v8
  %v12 = vmul.f32 %v8, %v10
  %v13 = vmul.f32 %v10, %v10
  %v14 = vmul.f32 %v11, -2.0
  %v15 = vmul.f32 %v12, -0.0
  %v16 = vadd.f32 %v14, %v15
  %v17 = vmul.f32 %v13, -2.0
  %v18 = vadd.f32 %v16, %v17
  %v19 = vmul.f32 %v18, 1.442695
  %v20 = vpow.pop %v19
  %v21 = vmul.f32 %v8, -0.0
  %v22 = vmul.f32 %v10, -4.0
  %v23 = vadd.f32 %v21, %v22
  %v24 = vadd.f32 %v18, -78.95683
  %v25 = vmul.f32 %v23, 6.2831855
  %v26 = vadd.f32 %v24, %v25
  %v27 = vmul.f32 %v26, 1.442695
  %v28 = vpow.pop %v27
  %v29 = vadd.f32 %v20, %v28
  %v30 = vsub.f32 %v24, %v25
  %v31 = vmul.f32 %v30, 1.442695
  %v32 = vpow.pop %v31
  %v33 = vadd.f32 %v29, %v32
  %v34 = vmul.f32 %v33, 0.63661975
  %35 = vst [vmem:[%s1] sm:$0x3] %v34
  %v36 = vmul.f32 %v11, -0.8138021
  %v37 = vmul.f32 %v12, 0.32552087
  %v38 = vadd.f32 %v36, %v37
  %v39 = vmul.f32 %v13, -0.8138021
  %v40 = vadd.f32 %v38, %v39
  %v41 = vmul.f32 %v40, 1.442695
  %v42 = vpow.pop %v41
  %v43 = vmul.f32 %v8, 0.32552087
  %v44 = vmul.f32 %v10, -1.6276042
  %v45 = vadd.f32 %v43, %v44
  %v46 = vadd.f32 %v40, -32.12762
  %v47 = vmul.f32 %v45, 6.2831855
  %v48 = vadd.f32 %v46, %v47
  %v49 = vmul.f32 %v48, 1.442695
  %v50 = vpow.pop %v49
  %v51 = vadd.f32 %v42, %v50
  %v52 = vsub.f32 %v46, %v47
  %v53 = vmul.f32 %v52, 1.442695
  %v54 = vpow.pop %v53
  %v55 = vadd.f32 %v51, %v54
  %v56 = vadd.f32 %v40, -128.51048
  %v57 = vmul.f32 %v45, 12.566371
  %v58 = vadd.f32 %v56, %v57
  %v59 = vmul.f32 %v58, 1.442695
  %v60 = vpow.pop %v59
  %v61 = vadd.f32 %v55, %v60
  %v62 = vsub.f32 %v56, %v57
  %v63 = vmul.f32 %v62, 1.442695
  %v64 = vpow.pop %v63
  %v65 = vadd.f32 %v61, %v64
  %v66 = vmul.f32 %v65, 0.12690377
  %s67 = scalar_lea.vmem %s1, 2
  %68 = vst [vmem:[%s67] sm:$0x3] %v66
  %v69 = vmul.f32 %v11, -0.5494506
  %v70 = vmul.f32 %v12, -0.32967034
  %v71 = vadd.f32 %v69, %v70
  %v72 = vmul.f32 %v13, -0.5494506
  %v73 = vadd.f32 %v71, %v72
  %v74 = vmul.f32 %v73, 1.442695
  %v75 = vpow.pop %v74
  %v76 = vmul.f32 %v8, -0.32967034
  %v77 = vmul.f32 %v10, -1.0989012
  %v78 = vadd.f32 %v76, %v77
  %v79 = vadd.f32 %v73, -21.691439
  %v80 = vmul.f32 %v78, 6.2831855
  %v81 = vadd.f32 %v79, %v80
  %v82 = vmul.f32 %v81, 1.442695
  %v83 = vpow.pop %v82
  %v84 = vadd.f32 %v75, %v83
  %v85 = vsub.f32 %v79, %v80
  %v86 = vmul.f32 %v85, 1.442695
  %v87 = vpow.pop %v86
  %v88 = vadd.f32 %v84, %v87
  %v89 = vadd.f32 %v73, -86.765755
  %v90 = vmul.f32 %v78, 12.566371
  %v91 = vadd.f32 %v89, %v90
  %v92 = vmul.f32 %v91, 1.442695
  %v93 = vpow.pop %v92
  %v94 = vadd.f32 %v88, %v93
  %v95 = vsub.f32 %v89, %v90
  %v96 = vmul.f32 %v95, 1.442695
  %v97 = vpow.pop %v96
  %v98 = vadd.f32 %v94, %v97
  %v99 = vmul.f32 %v98, 0.33367944
  %s100 = scalar_lea.vmem %s1, 4
  %101 = vst [vmem:[%s100] sm:$0x3] %v99
  %v102 = vmul.f32 %v11, -0.29884645
  %v103 = vmul.f32 %v12, 0.059769288
  %v104 = vadd.f32 %v102, %v103
  %v105 = vmul.f32 %v13, -0.29884645
  %v106 = vadd.f32 %v104, %v105
  %v107 = vmul.f32 %v106, 1.442695
  %v108 = vpow.pop %v107
  %v109 = vmul.f32 %v8, 0.059769288
  %v110 = vmul.f32 %v10, -0.5976929
  %v111 = vadd.f32 %v109, %v110
  %v112 = vadd.f32 %v106, -11.797985
  %v113 = vmul.f32 %v111, 6.2831855
  %v114 = vadd.f32 %v112, %v113
  %v115 = vmul.f32 %v114, 1.442695
  %v116 = vpow.pop %v115
  %v117 = vadd.f32 %v108, %v116
  %v118 = vsub.f32 %v112, %v113
  %v119 = vmul.f32 %v118, 1.442695
  %v120 = vpow.pop %v119
  %v121 = vadd.f32 %v117, %v120
  %v122 = vadd.f32 %v106, -47.19194
  %v123 = vmul.f32 %v111, 12.566371
  %v124 = vadd.f32 %v122, %v123
  %v125 = vmul.f32 %v124, 1.442695
  %v126 = vpow.pop %v125
  %v127 = vadd.f32 %v121, %v126
  %v128 = vsub.f32 %v122, %v123
  %v129 = vmul.f32 %v128, 1.442695
  %v130 = vpow.pop %v129
  %v131 = vadd.f32 %v127, %v130
  %v132 = vadd.f32 %v106, -106.18186
  %v133 = vmul.f32 %v111, 18.849556
  %v134 = vadd.f32 %v132, %v133
  %v135 = vmul.f32 %v134, 1.442695
  %v136 = vpow.pop %v135
  %v137 = vadd.f32 %v131, %v136
  %v138 = vsub.f32 %v132, %v133
  %v139 = vmul.f32 %v138, 1.442695
  %v140 = vpow.pop %v139
  %v141 = vadd.f32 %v137, %v140
  %v142 = vmul.f32 %v141, 0.14197344
  %s143 = scalar_lea.vmem %s1, 6
  %144 = vst [vmem:[%s143] sm:$0x3] %v142
  // Predicated region
  $region6: #{forward.1} parent=0 // pred_check
    _
  $region7: #{forward.1} parent=0 // pred_check_branch
    %146 = sbr.rel (0) target = $region9
  $region8: #{forward.1} parent=0 // pred_region
    _
  $region9: #{forward.1} parent=0 // pred_fallthru
    _
  // Predicated region
  $region10: #{forward.1} parent=0 // pred_check
    _
  $region11: #{forward.1} parent=0 // pred_check_branch
    %148 = sbr.rel (0) target = $region13
  $region12: #{forward.1} parent=0 // pred_region
    _
  $region13: #{forward.1} parent=0 // pred_fallthru
    _

</llo_original>
